<compile_context>
chip_gen: v5e
topology: v5e:2x2
jax: 0.10.0
libtpu: 0.0.40
codegen_flags: <defaults>
</compile_context>

<pallas_src>
import math
import numpy as np
import jax
import jax.numpy as jnp
from jax.experimental import pallas as pl
from jax.experimental.pallas import tpu as pltpu


# -----------------------------------------------------------------------------
# Deterministic parameter construction (mirrors FixedETFHead.__init__)
# -----------------------------------------------------------------------------
def generate_random_orthogonal_matrix(feat_in, num_classes, seed=0):
    rng = np.random.RandomState(seed)
    rand_mat = rng.random_sample(size=(feat_in, num_classes))
    orth_vec, _ = np.linalg.qr(rand_mat)
    orth_vec = orth_vec.astype(np.float32)
    assert np.allclose(
        orth_vec.T @ orth_vec, np.eye(num_classes, dtype=np.float32), atol=1e-5
    ), "orthogonality check failed"
    return orth_vec


def make_etf_params(in_feat, out_feat, base_class, seed=0):
    assert out_feat <= in_feat
    orth_vec = generate_random_orthogonal_matrix(in_feat, out_feat, seed=seed)
    i_nc_nc = np.eye(out_feat, dtype=np.float32)
    one_nc_nc = np.full((out_feat, out_feat), 1.0 / out_feat, dtype=np.float32)
    etf_vec = (orth_vec @ (i_nc_nc - one_nc_nc)) * math.sqrt(
        out_feat / (out_feat - 1)
    )
    # F.normalize(p=2, dim=0): normalize each column to unit L2 norm.
    norms = np.linalg.norm(etf_vec, ord=2, axis=0, keepdims=True)
    etf_vec = etf_vec / np.maximum(norms, 1e-12)
    # etf_null buffer (SVD null space of the base classes) is not used in
    # forward(); skipped here.
    etf_mag = np.ones((1, out_feat), dtype=np.float32)
    return (
        jnp.asarray(etf_vec, dtype=jnp.float32),
        jnp.asarray(etf_mag, dtype=jnp.float32),
    )


# -----------------------------------------------------------------------------
# Pallas kernel: fused per-class scaling + bf16 MXU matmul with f32 accumulation
# -----------------------------------------------------------------------------
def etf_head_kernel(x_ref, etf_ref, mag_ref, o_ref):
    # Scale each ETF column by its magnitude (VPU broadcast multiply).  The
    # (etf, mag) blocks have a constant index_map, so they are only DMA'd once
    # per core; recomputing this tiny (K, N) product per batch tile is hidden
    # under the (TB, K, N) matmul and keeps the kernel megacore-safe.
    w = (etf_ref[...] * mag_ref[...]).astype(jnp.bfloat16)   # (K, N_pad)
    o_ref[...] = jnp.dot(
        x_ref[...].astype(jnp.bfloat16),                     # (TB, K)
        w,
        preferred_element_type=jnp.float32,                  # f32 accumulation
    ).astype(o_ref.dtype)


def _round_up(x, m):
    return (x + m - 1) // m * m


def fixed_etf_head_forward(x, etf_vec, etf_mag):
    B, K = x.shape
    K2, N = etf_vec.shape
    assert K == K2 and etf_mag.shape == (1, N)

    # Lane-dense class dimension: pad to a multiple of 128.
    n_pad = _round_up(N, 128)

    # Batch tile: prefer 256 rows (MXU-friendly on v6e/v7x), shrink to stay
    # under a ~20 MiB VMEM budget (safe on v7x's 64 MiB physical VMEM).
    vmem_budget = 20 << 20
    tb = min(256, _round_up(B, 8))
    while tb > 8:
        need = (
            2 * tb * K * x.dtype.itemsize          # double-buffered x tiles
            + 2 * tb * n_pad * 4                   # double-buffered out tiles
            + K * n_pad * etf_vec.dtype.itemsize   # resident etf block
            + n_pad * 4                            # resident magnitude row
        )
        if need <= vmem_budget:
            break
        tb //= 2
    b_pad = _round_up(B, tb)

    # TODO(synk): if in_feat ever gets large enough that the resident weight no
    # longer fits VMEM, add a K grid axis ("arbitrary") with an f32 accumulator.

    x_p = jnp.pad(x, ((0, b_pad - B), (0, 0))) if b_pad != B else x
    etf_p = jnp.pad(etf_vec, ((0, 0), (0, n_pad - N))) if n_pad != N else etf_vec
    mag_p = jnp.pad(etf_mag, ((0, 0), (0, n_pad - N))) if n_pad != N else etf_mag

    out = pl.pallas_call(
        etf_head_kernel,
        out_shape=jax.ShapeDtypeStruct((b_pad, n_pad), x.dtype),
        grid_spec=pl.GridSpec(
            grid=(b_pad // tb,),
            in_specs=[
                pl.BlockSpec((tb, K), lambda i: (i, 0)),      # x: batch-tiled
                pl.BlockSpec((K, n_pad), lambda i: (0, 0)),   # etf: resident
                pl.BlockSpec((1, n_pad), lambda i: (0, 0)),   # mag: resident
            ],
            out_specs=pl.BlockSpec((tb, n_pad), lambda i: (i, 0)),
        ),
        compiler_params=pltpu.CompilerParams(
            dimension_semantics=("parallel",),   # shard batch across TCs (v7x)
            vmem_limit_bytes=28 << 20,
        ),
    )(x_p, etf_p, mag_p)

    return out[:B, :N]


if __name__ == "__main__":
    # Small shapes consistent with the module: in_feat=32, out_feat=16, base=8.
    B, in_feat, out_feat, base_class = 8, 32, 16, 8

    etf_vec, etf_mag = make_etf_params(in_feat, out_feat, base_class, seed=0)

    key = jax.random.PRNGKey(0)
    x = jax.random.normal(key, (B, in_feat), dtype=jnp.float32)

    out = fixed_etf_head_forward(x, etf_vec, etf_mag)
    out = jax.block_until_ready(out)

    # Reference check in plain JAX (f32).  The kernel feeds bf16 to the MXU
    # with f32 accumulation, so allow bf16-level tolerance.
    ref = x @ (etf_vec * etf_mag)
    assert out.shape == (B, out_feat)
    assert jnp.allclose(out, ref, atol=2e-2, rtol=2e-2), "mismatch vs reference"

    print("KERNEL_OK")
</pallas_src>

<mosaic_0001>
module attributes {stable_mosaic.version = 11 : i64} {
  func.func @etf_head_kernel(%arg0: i32, %arg1: memref<8x32xf32, #tpu.memory_space<vmem>>, %arg2: memref<32x128xf32, #tpu.memory_space<vmem>>, %arg3: memref<1x128xf32, #tpu.memory_space<vmem>>, %arg4: memref<8x128xf32, #tpu.memory_space<vmem>>) attributes {dimension_semantics = [#tpu.dimension_semantics<parallel>], iteration_bounds = array<i64: 1>, scalar_prefetch = 0 : i64, scratch_operands = 0 : i64, tpu.core_type = #tpu.core_type<tc>, window_params = [{transform_indices = @transform_0, window_bounds = array<i64: 8, 32>}, {pipeline_mode = #tpu.pipeline_mode<synchronous>, transform_indices = @transform_1, window_bounds = array<i64: 32, 128>}, {pipeline_mode = #tpu.pipeline_mode<synchronous>, transform_indices = @transform_2, window_bounds = array<i64: 1, 128>}, {transform_indices = @transform_3, window_bounds = array<i64: 8, 128>}]} {
    %c0 = arith.constant 0 : index
    %c0_0 = arith.constant 0 : index
    %0 = vector.load %arg2[%c0, %c0_0] : memref<32x128xf32, #tpu.memory_space<vmem>>, vector<32x128xf32>
    %c0_1 = arith.constant 0 : index
    %c0_2 = arith.constant 0 : index
    %1 = vector.load %arg3[%c0_1, %c0_2] : memref<1x128xf32, #tpu.memory_space<vmem>>, vector<1x128xf32>
    %2 = vector.broadcast %1 : vector<1x128xf32> to vector<32x128xf32>
    %3 = arith.mulf %0, %2 : vector<32x128xf32>
    %4 = arith.truncf %3 : vector<32x128xf32> to vector<32x128xbf16>
    %c0_3 = arith.constant 0 : index
    %c0_4 = arith.constant 0 : index
    %5 = vector.load %arg1[%c0_3, %c0_4] : memref<8x32xf32, #tpu.memory_space<vmem>>, vector<8x32xf32>
    %6 = arith.truncf %5 : vector<8x32xf32> to vector<8x32xbf16>
    %cst = arith.constant dense<0.000000e+00> : vector<8x128xf32>
    %7 = tpu.matmul %6, %4, %cst {dimension_numbers = #tpu.dot_dimension_numbers<[1], [0], [0], [1], [0, 0, 1, 1], [], []>} : vector<8x32xbf16>, vector<32x128xbf16>, vector<8x128xf32> -> vector<8x128xf32>
    %c0_5 = arith.constant 0 : index
    %c0_6 = arith.constant 0 : index
    %8 = vector.load %arg4[%c0_5, %c0_6] : memref<8x128xf32, #tpu.memory_space<vmem>>, vector<8x128xf32>
    tpu.vector_store %arg4[%c0_5, %c0_6], %7 {strides = array<i32>} : memref<8x128xf32, #tpu.memory_space<vmem>>, vector<8x128xf32>,
    return
  }
  func.func @transform_0(%arg0: i32) -> (i32, i32) {
    %c0_i32 = arith.constant 0 : i32
    %c0_i32_0 = arith.constant 0 : i32
    return %arg0, %c0_i32 : i32, i32
  }
  func.func @transform_1(%arg0: i32) -> (i32, i32) {
    %c0_i32 = arith.constant 0 : i32
    %c0_i32_0 = arith.constant 0 : i32
    %c0_i32_1 = arith.constant 0 : i32
    return %c0_i32, %c0_i32_0 : i32, i32
  }
  func.func @transform_2(%arg0: i32) -> (i32, i32) {
    %c0_i32 = arith.constant 0 : i32
    %c0_i32_0 = arith.constant 0 : i32
    %c0_i32_1 = arith.constant 0 : i32
    return %c0_i32, %c0_i32_0 : i32, i32
  }
  func.func @transform_3(%arg0: i32) -> (i32, i32) {
    %c0_i32 = arith.constant 0 : i32
    %c0_i32_0 = arith.constant 0 : i32
    return %arg0, %c0_i32 : i32, i32
  }
}

</mosaic_0001>

<llo_original>
// kernel: tpu_custom_call.1
$region0: #{tpu_custom_call.1}
  #allocation0 [shape = 'u32[]', space=smem, size = 0x4, offset = 0x4, fixed_abs, tag = 'smem constant byte address 0x4 - core index']
  #allocation1 [shape = 'u32[72,128]{1,0:T(1,128)}', space=vmem, size = 0x9000, scoped, tag = 'internal scratch']
  %s0 = inlined_call_operand.hbm [shape: f32[8,32], index: 0, kind: input, shape index: {}]
  %s1 = inlined_call_operand.hbm [shape: f32[32,128], index: 1, kind: input, shape index: {}]
  %s2 = inlined_call_operand.vmem [shape: f32[1,128], index: 2, kind: input, shape index: {}]
  %s3 = inlined_call_operand.hbm [shape: f32[8,128], index: 3, kind: output, shape index: {}]
  %s4 = sld [smem:[#allocation0]]
  $region30: #{tpu_custom_call.1} parent=0
    _
  %s6 = ssub.s32 1, %s4
  %s7 = scalar_select 0, %s6, %s4
  $region1: #{tpu_custom_call.1} parent=0
    #allocation2 [shape = 'u8[4096]{0}', space=vmem, size = 0x1000, scoped, tag = 'input window, operand 0, single buffered']
    #allocation3 [shape = 's32[1]{0}', space=sflag, size = 0x4, scoped, tag = 'scoped memory for tpu_custom_call.1']
    #allocation4 [shape = 's32[1]{0}', space=sflag, size = 0x4, scoped, tag = 'scoped memory for tpu_custom_call.1']
    #allocation5 [shape = 'u8[16384]{0}', space=vmem, size = 0x4000, scoped, tag = 'input window, operand 1, single buffered']
    #allocation6 [shape = 's32[1]{0}', space=sflag, size = 0x4, scoped, tag = 'scoped memory for tpu_custom_call.1']
    #allocation7 [shape = 'u8[4096]{0}', space=vmem, size = 0x1000, scoped, tag = 'output window, operand 0, single buffered']
    %8 = vsyncpa [#allocation3], 0
    %9 = vsyncpa [#allocation6], 0
    %10 = vsyncpa [#allocation4], 0
    // Predicated region
    $region2: #{tpu_custom_call.1} parent=1 // pred_check
      _
    $region3: #{tpu_custom_call.1} parent=1 // pred_check_branch
      %12 = sbr.rel (0) target = $region5
    $region4: #{tpu_custom_call.1} parent=1 // pred_region
      %14 = vsyncadd [#allocation3], 0
      %s16 = sshll.u32 %s0, 4
      %s17 = int_to_ptr.hbm [resolvable:$true] %s16
      %s18 = sshll.u32 [#allocation2], 4
      %s19 = int_to_ptr.vmem [resolvable:$true] %s18
      %21 = dma.hbm_to_vmem [thread:$0]  %s17, 128, %s19, [#allocation3]
    $region5: #{tpu_custom_call.1} parent=1 // pred_fallthru
      _
    // Predicated region
    $region6: #{tpu_custom_call.1} parent=1 // pred_check
      _
    $region7: #{tpu_custom_call.1} parent=1 // pred_check_branch
      %23 = sbr.rel (0) target = $region9
    $region8: #{tpu_custom_call.1} parent=1 // pred_region
      %25 = vsyncadd [#allocation6], 0
      %s26 = sshll.u32 %s1, 4
      %s27 = int_to_ptr.hbm [resolvable:$true] %s26
      %s28 = sshll.u32 [#allocation5], 4
      %s29 = int_to_ptr.vmem [resolvable:$true] %s28
      %34 = dma.hbm_to_vmem [thread:$0]  %s27, 512, %s29, [#allocation6], 128, 128, 8
    $region9: #{tpu_custom_call.1} parent=1 // pred_fallthru
      _
    // Predicated region
    $region10: #{tpu_custom_call.1} parent=1 // pred_check
      _
    $region11: #{tpu_custom_call.1} parent=1 // pred_check_branch
      %36 = sbr.rel (0) target = $region13
    $region12: #{tpu_custom_call.1} parent=1 // pred_region
      _
    $region13: #{tpu_custom_call.1} parent=1 // pred_fallthru
      _
    // Predicated region
    $region14: #{tpu_custom_call.1} parent=1 // pred_check
      _
    $region15: #{tpu_custom_call.1} parent=1 // pred_check_branch
      %38 = sbr.rel (0) target = $region17
    $region16: #{tpu_custom_call.1} parent=1 // pred_region
      %40 = dma.done [#allocation3], 128
    $region17: #{tpu_custom_call.1} parent=1 // pred_fallthru
      _
    // Predicated region
    $region18: #{tpu_custom_call.1} parent=1 // pred_check
      _
    $region19: #{tpu_custom_call.1} parent=1 // pred_check_branch
      %42 = sbr.rel (0) target = $region21
    $region20: #{tpu_custom_call.1} parent=1 // pred_region
      %44 = dma.done [#allocation6], 512
    $region21: #{tpu_custom_call.1} parent=1 // pred_fallthru
      _
    %v46 = vld [vmem:[#allocation5] sm:$0xff]
    %v47 = vld [vmem:[#allocation5 + $0x8] sm:$0xff]
    %v48 = vld [vmem:[#allocation5 + $0x10] sm:$0xff]
    %v49 = vld [vmem:[#allocation5 + $0x18] sm:$0xff]
    %v50 = vld [vmem:[%s2] sm:$0x1]
    %v52 = vperm.slane %v50, 0
    %v54 = vmul.f32 %v46, %v52
    %v55 = vmul.f32 %v47, %v52
    %v56 = vmul.f32 %v48, %v52
    %v57 = vmul.f32 %v49, %v52
    %v58 = vpack.c.bf16 %v55, %v54
    %v59 = vpack.c.bf16 %v57, %v56
    %v60 = vld [vmem:[#allocation2] sm:$0xff]
    %v61 = vpack.c.bf16 %v60, %v60
    %vm62 = vcmask 261120
    %v64 = vsel %vm62, %v61, 0
    %66 = vmatpush.bf16.msra.mxu0 0
    %67 = vmatpush.bf16.msra.mxu0 0
    %68 = vmatpush.bf16.msra.mxu0 0
    %69 = vmatpush.bf16.msra.mxu0 0
    %70 = vmatpush.bf16.msra.mxu0 0
    %71 = vmatpush.bf16.msra.mxu0 0
    %72 = vmatpush.bf16.msra.mxu0 %v59
    %73 = vmatpush.bf16.msra.mxu0 %v58
    %74 = vmatmul.bf16.gmra.mxu0 %v64
    %v75 = vpop.f32.mrf.mxu0
    %v76 = vadd.f32 0.0, %v75
    %v77 = vpop.f32.mrf.mxu0
    %78 = vdwg.mxu0
    %79 = vst [vmem:[#allocation7] sm:$0xff] %v76
    // Predicated region
    $region22: #{tpu_custom_call.1} parent=1 // pred_check
      _
    $region23: #{tpu_custom_call.1} parent=1 // pred_check_branch
      %81 = sbr.rel (0) target = $region25
    $region24: #{tpu_custom_call.1} parent=1 // pred_region
      %83 = vsyncadd [#allocation4], 0
      %s85 = sshll.u32 [#allocation7], 4
      %s86 = int_to_ptr.vmem [resolvable:$true] %s85
      %s87 = sshll.u32 %s3, 4
      %s88 = int_to_ptr.hbm [resolvable:$true] %s87
      %90 = dma.vmem_to_hbm [thread:$0]  %s86, 128, %s88, [#allocation4]
    $region25: #{tpu_custom_call.1} parent=1 // pred_fallthru
      _
    // Predicated region
    $region26: #{tpu_custom_call.1} parent=1 // pred_check
      _
    $region27: #{tpu_custom_call.1} parent=1 // pred_check_branch
      %92 = sbr.rel (0) target = $region29
    $region28: #{tpu_custom_call.1} parent=1 // pred_region
      %94 = dma.done [#allocation4], 128
    $region29: #{tpu_custom_call.1} parent=1 // pred_fallthru
      _
    %95 = vsyncpa [#allocation3], 1
    %96 = vsyncpa [#allocation6], 1
    %97 = vsyncpa [#allocation4], 1

</llo_original>
